<compile_context>
chip_gen: v5e
topology: v5e:2x2
jax: 0.10.0
libtpu: 0.0.40
codegen_flags: <defaults>
</compile_context>

<pallas_src>
import functools

import jax
import jax.numpy as jnp
from jax import lax
from jax.experimental import pallas as pl
from jax.experimental.pallas import tpu as pltpu

SELU_ALPHA = 1.6732632423543772
SELU_SCALE = 1.0507009873554805

_LANE = 128      # lane width (last dim granularity)
_SUBLANE = 8     # f32 sublane granularity (second-to-last dim)


def _cdiv(a, b):
    return (a + b - 1) // b


def _round_up(n, m):
    return _cdiv(n, m) * m


def _selu(v):
    # SELU(x) = scale * (x if x > 0 else alpha * (exp(x) - 1));  exp -> EUP slot
    return SELU_SCALE * jnp.where(v > 0, v, SELU_ALPHA * (jnp.exp(v) - 1.0))


def _num_tensorcores():
    # v7x has 2 TensorCores per chip; splitting the batch grid into >=2 tiles
    # lets dimension_semantics=("parallel",) use both. v5e/v6e have 1 TC.
    try:
        kind = jax.devices()[0].device_kind.lower()
        if "v7" in kind:
            return 2
    except Exception:
        pass
    return 1


# --------------------------------------------------------------------------
# Kernels
# --------------------------------------------------------------------------

def _mlp_from_refs(x, w1_ref, w2_ref, w3_ref, w4_ref, b):
    """One evaluation of the 4-layer SELU MLP on a (bm, dp) tile.

    Weights refs hold the MXU operand dtype; accumulation stays f32.
    `b` is the (4, P) stacked-bias slab (f32).
    """
    hp = w1_ref.shape[1]   # padded hidden dim (static)
    dp = w4_ref.shape[1]   # padded input/output dim (static)
    cd = w1_ref.dtype      # MXU operand dtype

    h = jnp.dot(x.astype(cd), w1_ref[...], preferred_element_type=jnp.float32) + b[0:1, :hp]
    h = _selu(h)
    h = jnp.dot(h.astype(cd), w2_ref[...], preferred_element_type=jnp.float32) + b[1:2, :hp]
    h = _selu(h)
    h = jnp.dot(h.astype(cd), w3_ref[...], preferred_element_type=jnp.float32) + b[2:3, :hp]
    h = _selu(h)
    return jnp.dot(h.astype(cd), w4_ref[...], preferred_element_type=jnp.float32) + b[3:4, :dp]


def _odefunc_kernel(x_ref, w1_ref, w2_ref, w3_ref, w4_ref, b_ref, o_ref):
    out = _mlp_from_refs(x_ref[...], w1_ref, w2_ref, w3_ref, w4_ref, b_ref[...])
    o_ref[...] = out.astype(o_ref.dtype)


def _odefunc_euler_kernel(dt, n_steps, x_ref, w1_ref, w2_ref, w3_ref, w4_ref,
                          b_ref, o_ref):
    # n_steps fused evaluations of f in one kernel; weights never leave VMEM.
    b = b_ref[...]

    def body(_, x):
        return x + dt * _mlp_from_refs(x, w1_ref, w2_ref, w3_ref, w4_ref, b)

    x = lax.fori_loop(0, n_steps, body, x_ref[...].astype(jnp.float32))
    o_ref[...] = x.astype(o_ref.dtype)


# --------------------------------------------------------------------------
# Wrappers
# --------------------------------------------------------------------------

def _prepare_call(x, params, compute_dtype, max_block_batch, min_tiles):
    (w1, b1), (w2, b2), (w3, b3), (w4, b4) = params
    batch, input_dim = x.shape
    hidden_dim = w1.shape[1]

    # Enforce (in_features, out_features) layout (= torch nn.Linear weight.T).
    assert (w1.shape == (input_dim, hidden_dim)
            and w2.shape == (hidden_dim, hidden_dim)
            and w3.shape == (hidden_dim, hidden_dim)
            and w4.shape == (hidden_dim, input_dim)), (
        "weights must be (in_features, out_features); convert PyTorch "
        "(out, in) weights with params_from_torch_layout() first")

    # Lane-dense feature padding (128). For large hidden on v6e/v7x (2x256^2
    # MXU) rounding hp to 256 fills the array better; at hid=32 it is moot.
    dp = _round_up(input_dim, _LANE)
    hp = _round_up(hidden_dim, _LANE)
    pb = max(dp, hp)

    # Batch tiling: few large tiles, padding waste bounded by one sublane tile.
    if min_tiles is None:
        min_tiles = _num_tensorcores()
    b_eff = max(batch, _SUBLANE)
    n_tiles = max(_cdiv(b_eff, max_block_batch), min_tiles)
    n_tiles = min(n_tiles, _cdiv(b_eff, _SUBLANE))        # >= 1 sublane per tile
    bm = _round_up(_cdiv(b_eff, n_tiles), _SUBLANE)
    b_pad = _round_up(b_eff, bm)

    f32 = jnp.float32
    if compute_dtype is None:
        # bf16 MXU operands only pay off at larger hidden sizes; default keeps
        # the f32 path (bit-comparable with the f32 reference) at small sizes.
        compute_dtype = jnp.bfloat16 if hidden_dim >= 256 else f32
    cd = jnp.dtype(compute_dtype)

    def pad2(a, r, c, dt_):
        a = a.astype(f32)
        return jnp.pad(a, ((0, r - a.shape[0]), (0, c - a.shape[1]))).astype(dt_)

    # x/out tiles are the only per-grid-step HBM traffic; stream x in the
    # compute dtype (halves DMA bytes on the bf16 path).
    x_p = jnp.pad(x.astype(f32), ((0, b_pad - batch), (0, dp - input_dim))).astype(cd)
    w1p = pad2(w1, dp, hp, cd)
    w2p = pad2(w2, hp, hp, cd)
    w3p = pad2(w3, hp, hp, cd)
    w4p = pad2(w4, hp, dp, cd)

    # One (4, P) bias slab; padded entries are zero (keeps padded channels 0).
    b_stack = jnp.zeros((4, pb), f32)
    b_stack = b_stack.at[0, :hidden_dim].set(b1.astype(f32).reshape(-1))
    b_stack = b_stack.at[1, :hidden_dim].set(b2.astype(f32).reshape(-1))
    b_stack = b_stack.at[2, :hidden_dim].set(b3.astype(f32).reshape(-1))
    b_stack = b_stack.at[3, :input_dim].set(b4.astype(f32).reshape(-1))

    # VMEM budget: weights are double-buffered by BlockSpec even at a constant
    # block index; only raise the scoped limit when we actually need it
    # (v5e scoped default 16 MiB, v6e/v7x 32 MiB, v7x physical 64 MiB).
    cd_bytes = cd.itemsize
    out_bytes = jnp.dtype(x.dtype).itemsize
    weight_bytes = (dp * hp + 2 * hp * hp + hp * dp) * cd_bytes + 4 * pb * 4
    io_bytes = 2 * bm * dp * (cd_bytes + out_bytes)       # double-buffered x / out
    act_bytes = 4 * bm * hp * 4                           # activation slack (f32)
    est = 2 * weight_bytes + io_bytes + act_bytes
    vmem_limit = None if est <= (14 << 20) else int(min(2 * est, 64 << 20))

    in_specs = [
        pl.BlockSpec((bm, dp), lambda i: (i, 0)),   # x tile walks the grid
        pl.BlockSpec((dp, hp), lambda i: (0, 0)),   # weights resident in VMEM
        pl.BlockSpec((hp, hp), lambda i: (0, 0)),
        pl.BlockSpec((hp, hp), lambda i: (0, 0)),
        pl.BlockSpec((hp, dp), lambda i: (0, 0)),
        pl.BlockSpec((4, pb), lambda i: (0, 0)),    # stacked biases, resident
    ]
    out_specs = pl.BlockSpec((bm, dp), lambda i: (i, 0))
    grid = (b_pad // bm,)
    out_shape = jax.ShapeDtypeStruct((b_pad, dp), x.dtype)
    cparams = pltpu.CompilerParams(
        dimension_semantics=("parallel",),          # v7x: tiles split over 2 TCs
        vmem_limit_bytes=vmem_limit)

    operands = (x_p, w1p, w2p, w3p, w4p, b_stack)
    return operands, grid, in_specs, out_specs, out_shape, cparams, (batch, input_dim)


def odefunc_forward(t, x, params, *, compute_dtype=None, max_block_batch=1024,
                    min_tiles=None):
    """ODEFunc.forward(t, x). `t` is accepted but unused (matches the module)."""
    del t
    operands, grid, in_specs, out_specs, out_shape, cparams, (batch, input_dim) = \
        _prepare_call(x, params, compute_dtype, max_block_batch, min_tiles)
    out_padded = pl.pallas_call(
        _odefunc_kernel,
        out_shape=out_shape,
        grid=grid,
        in_specs=in_specs,
        out_specs=out_specs,
        compiler_params=cparams,
    )(*operands)
    return out_padded[:batch, :input_dim]


def odefunc_euler_integrate(t0, x, params, *, dt, n_steps, compute_dtype=None,
                            max_block_batch=1024, min_tiles=None):
    """Fused explicit-Euler integration: x_{k+1} = x_k + dt * f(t_k, x_k).

    All `n_steps` evaluations of ODEFunc run inside a single pallas_call
    (in-kernel fori_loop), amortizing launch overhead and keeping the weight
    and bias slabs VMEM-resident across every evaluation.
    """
    del t0  # ODEFunc ignores t
    operands, grid, in_specs, out_specs, out_shape, cparams, (batch, input_dim) = \
        _prepare_call(x, params, compute_dtype, max_block_batch, min_tiles)
    kernel = functools.partial(_odefunc_euler_kernel, float(dt), int(n_steps))
    out_padded = pl.pallas_call(
        kernel,
        out_shape=out_shape,
        grid=grid,
        in_specs=in_specs,
        out_specs=out_specs,
        compiler_params=cparams,
    )(*operands)
    return out_padded[:batch, :input_dim]


# --------------------------------------------------------------------------
# Parameter helpers & references
# --------------------------------------------------------------------------

def params_from_torch_layout(torch_params):
    """Convert [(W(out,in), b(out,)), ...] (PyTorch nn.Linear layout) to the
    (in_features, out_features) layout this kernel expects."""
    return [(jnp.asarray(w).T, jnp.asarray(b).reshape(1, -1)) for w, b in torch_params]


def init_params(key, input_dim, hidden_dim):
    """Deterministic init matching the module: weight ~ N(0, 0.001), bias = 0.5."""
    ks = jax.random.split(key, 4)
    dims = [(input_dim, hidden_dim),
            (hidden_dim, hidden_dim),
            (hidden_dim, hidden_dim),
            (hidden_dim, input_dim)]
    params = []
    for k, (din, dout) in zip(ks, dims):
        w = 0.001 * jax.random.normal(k, (din, dout), dtype=jnp.float32)
        b = jnp.full((1, dout), 0.5, dtype=jnp.float32)
        params.append((w, b))
    return params


def odefunc_reference(t, x, params):
    del t
    h = x
    for i, (w, b) in enumerate(params):
        h = h @ w + b
        if i < len(params) - 1:
            h = SELU_SCALE * jnp.where(h > 0, h, SELU_ALPHA * (jnp.exp(h) - 1.0))
    return h


def euler_reference(t0, x, params, dt, n_steps):
    h = x
    for _ in range(n_steps):
        h = h + dt * odefunc_reference(t0, h, params)
    return h


if __name__ == "__main__":
    key = jax.random.PRNGKey(0)
    k_param, k_x, k_x2, k_x3, k_x4 = jax.random.split(key, 5)

    batch, input_dim, hidden_dim = 2, 8, 32
    params = init_params(k_param, input_dim, hidden_dim)
    t = jnp.float32(0.0)

    # 1) Small case (module's nominal shapes): single grid step.
    x = jax.random.normal(k_x, (batch, input_dim), dtype=jnp.float32)
    out = jax.block_until_ready(odefunc_forward(t, x, params))
    ref = odefunc_reference(t, x, params)
    assert out.shape == (batch, input_dim)
    assert jnp.allclose(out, ref, atol=1e-5, rtol=1e-5), "mismatch vs reference (small)"

    # 2) Multi-tile grid with resident weights (forces grid=(2,), the v7x path).
    big_batch = 512
    xb = jax.random.normal(k_x2, (big_batch, input_dim), dtype=jnp.float32)
    outb = jax.block_until_ready(odefunc_forward(t, xb, params, min_tiles=2))
    refb = odefunc_reference(t, xb, params)
    assert outb.shape == (big_batch, input_dim)
    assert jnp.allclose(outb, refb, atol=1e-5, rtol=1e-5), "mismatch vs reference (gridded)"

    # 3) Awkward batch (tight padding path: 260 -> 264 padded rows, not 512).
    odd_batch = 260
    xo = jax.random.normal(k_x3, (odd_batch, input_dim), dtype=jnp.float32)
    outo = jax.block_until_ready(odefunc_forward(t, xo, params))
    refo = odefunc_reference(t, xo, params)
    assert outo.shape == (odd_batch, input_dim)
    assert jnp.allclose(outo, refo, atol=1e-5, rtol=1e-5), "mismatch vs reference (odd batch)"

    # 4) Fused multi-evaluation Euler integration (16 f-evals in one pallas_call).
    xe = jax.random.normal(k_x4, (64, input_dim), dtype=jnp.float32)
    dt, n_steps = 0.05, 16
    oute = jax.block_until_ready(
        odefunc_euler_integrate(t, xe, params, dt=dt, n_steps=n_steps))
    refe = euler_reference(t, xe, params, dt, n_steps)
    assert oute.shape == (64, input_dim)
    assert jnp.allclose(oute, refe, atol=1e-4, rtol=1e-4), "mismatch vs reference (euler)"

    print("KERNEL_OK")
</pallas_src>

<mosaic_0001>
module attributes {stable_mosaic.version = 11 : i64} {
  func.func @_odefunc_kernel(%arg0: i32, %arg1: memref<8x128xf32, #tpu.memory_space<vmem>>, %arg2: memref<128x128xf32, #tpu.memory_space<vmem>>, %arg3: memref<128x128xf32, #tpu.memory_space<vmem>>, %arg4: memref<128x128xf32, #tpu.memory_space<vmem>>, %arg5: memref<128x128xf32, #tpu.memory_space<vmem>>, %arg6: memref<4x128xf32, #tpu.memory_space<vmem>>, %arg7: memref<8x128xf32, #tpu.memory_space<vmem>>) attributes {dimension_semantics = [#tpu.dimension_semantics<parallel>], iteration_bounds = array<i64: 1>, scalar_prefetch = 0 : i64, scratch_operands = 0 : i64, tpu.core_type = #tpu.core_type<tc>, window_params = [{transform_indices = @transform_0, window_bounds = array<i64: 8, 128>}, {pipeline_mode = #tpu.pipeline_mode<synchronous>, transform_indices = @transform_1, window_bounds = array<i64: 128, 128>}, {pipeline_mode = #tpu.pipeline_mode<synchronous>, transform_indices = @transform_2, window_bounds = array<i64: 128, 128>}, {pipeline_mode = #tpu.pipeline_mode<synchronous>, transform_indices = @transform_3, window_bounds = array<i64: 128, 128>}, {pipeline_mode = #tpu.pipeline_mode<synchronous>, transform_indices = @transform_4, window_bounds = array<i64: 128, 128>}, {pipeline_mode = #tpu.pipeline_mode<synchronous>, transform_indices = @transform_5, window_bounds = array<i64: 4, 128>}, {transform_indices = @transform_6, window_bounds = array<i64: 8, 128>}]} {
    %c0 = arith.constant 0 : index
    %c0_0 = arith.constant 0 : index
    %0 = vector.load %arg1[%c0, %c0_0] : memref<8x128xf32, #tpu.memory_space<vmem>>, vector<8x128xf32>
    %c0_1 = arith.constant 0 : index
    %c0_2 = arith.constant 0 : index
    %1 = vector.load %arg6[%c0_1, %c0_2] : memref<4x128xf32, #tpu.memory_space<vmem>>, vector<4x128xf32>
    %c0_3 = arith.constant 0 : index
    %c0_4 = arith.constant 0 : index
    %2 = vector.load %arg2[%c0_3, %c0_4] : memref<128x128xf32, #tpu.memory_space<vmem>>, vector<128x128xf32>
    %cst = arith.constant dense<0.000000e+00> : vector<8x128xf32>
    %3 = tpu.matmul %0, %2, %cst {dimension_numbers = #tpu.dot_dimension_numbers<[1], [0], [0], [1], [0, 0, 1, 1], [], []>} : vector<8x128xf32>, vector<128x128xf32>, vector<8x128xf32> -> vector<8x128xf32>
    %4 = vector.extract_strided_slice %1 {offsets = [0, 0], sizes = [1, 128], strides = [1, 1]} : vector<4x128xf32> to vector<1x128xf32>
    %5 = vector.broadcast %4 : vector<1x128xf32> to vector<8x128xf32>
    %6 = arith.addf %3, %5 : vector<8x128xf32>
    %cst_5 = arith.constant 0.000000e+00 : f32
    %7 = vector.broadcast %cst_5 : f32 to vector<8x128xf32>
    %8 = arith.cmpf ogt, %6, %7 : vector<8x128xf32>
    %9 = math.exp %6 : vector<8x128xf32>
    %cst_6 = arith.constant 1.000000e+00 : f32
    %10 = vector.broadcast %cst_6 : f32 to vector<8x128xf32>
    %11 = arith.subf %9, %10 : vector<8x128xf32>
    %cst_7 = arith.constant 1.67326319 : f32
    %12 = vector.broadcast %cst_7 : f32 to vector<8x128xf32>
    %13 = arith.mulf %12, %11 : vector<8x128xf32>
    %14 = arith.select %8, %6, %13 : vector<8x128xi1>, vector<8x128xf32>
    %cst_8 = arith.constant 1.05070102 : f32
    %15 = vector.broadcast %cst_8 : f32 to vector<8x128xf32>
    %16 = arith.mulf %15, %14 : vector<8x128xf32>
    %c0_9 = arith.constant 0 : index
    %c0_10 = arith.constant 0 : index
    %17 = vector.load %arg3[%c0_9, %c0_10] : memref<128x128xf32, #tpu.memory_space<vmem>>, vector<128x128xf32>
    %cst_11 = arith.constant dense<0.000000e+00> : vector<8x128xf32>
    %18 = tpu.matmul %16, %17, %cst_11 {dimension_numbers = #tpu.dot_dimension_numbers<[1], [0], [0], [1], [0, 0, 1, 1], [], []>} : vector<8x128xf32>, vector<128x128xf32>, vector<8x128xf32> -> vector<8x128xf32>
    %19 = vector.extract_strided_slice %1 {offsets = [1, 0], sizes = [1, 128], strides = [1, 1]} : vector<4x128xf32> to vector<1x128xf32>
    %20 = vector.broadcast %19 : vector<1x128xf32> to vector<8x128xf32>
    %21 = arith.addf %18, %20 : vector<8x128xf32>
    %cst_12 = arith.constant 0.000000e+00 : f32
    %22 = vector.broadcast %cst_12 : f32 to vector<8x128xf32>
    %23 = arith.cmpf ogt, %21, %22 : vector<8x128xf32>
    %24 = math.exp %21 : vector<8x128xf32>
    %cst_13 = arith.constant 1.000000e+00 : f32
    %25 = vector.broadcast %cst_13 : f32 to vector<8x128xf32>
    %26 = arith.subf %24, %25 : vector<8x128xf32>
    %cst_14 = arith.constant 1.67326319 : f32
    %27 = vector.broadcast %cst_14 : f32 to vector<8x128xf32>
    %28 = arith.mulf %27, %26 : vector<8x128xf32>
    %29 = arith.select %23, %21, %28 : vector<8x128xi1>, vector<8x128xf32>
    %cst_15 = arith.constant 1.05070102 : f32
    %30 = vector.broadcast %cst_15 : f32 to vector<8x128xf32>
    %31 = arith.mulf %30, %29 : vector<8x128xf32>
    %c0_16 = arith.constant 0 : index
    %c0_17 = arith.constant 0 : index
    %32 = vector.load %arg4[%c0_16, %c0_17] : memref<128x128xf32, #tpu.memory_space<vmem>>, vector<128x128xf32>
    %cst_18 = arith.constant dense<0.000000e+00> : vector<8x128xf32>
    %33 = tpu.matmul %31, %32, %cst_18 {dimension_numbers = #tpu.dot_dimension_numbers<[1], [0], [0], [1], [0, 0, 1, 1], [], []>} : vector<8x128xf32>, vector<128x128xf32>, vector<8x128xf32> -> vector<8x128xf32>
    %34 = vector.extract_strided_slice %1 {offsets = [2, 0], sizes = [1, 128], strides = [1, 1]} : vector<4x128xf32> to vector<1x128xf32>
    %35 = vector.broadcast %34 : vector<1x128xf32> to vector<8x128xf32>
    %36 = arith.addf %33, %35 : vector<8x128xf32>
    %cst_19 = arith.constant 0.000000e+00 : f32
    %37 = vector.broadcast %cst_19 : f32 to vector<8x128xf32>
    %38 = arith.cmpf ogt, %36, %37 : vector<8x128xf32>
    %39 = math.exp %36 : vector<8x128xf32>
    %cst_20 = arith.constant 1.000000e+00 : f32
    %40 = vector.broadcast %cst_20 : f32 to vector<8x128xf32>
    %41 = arith.subf %39, %40 : vector<8x128xf32>
    %cst_21 = arith.constant 1.67326319 : f32
    %42 = vector.broadcast %cst_21 : f32 to vector<8x128xf32>
    %43 = arith.mulf %42, %41 : vector<8x128xf32>
    %44 = arith.select %38, %36, %43 : vector<8x128xi1>, vector<8x128xf32>
    %cst_22 = arith.constant 1.05070102 : f32
    %45 = vector.broadcast %cst_22 : f32 to vector<8x128xf32>
    %46 = arith.mulf %45, %44 : vector<8x128xf32>
    %c0_23 = arith.constant 0 : index
    %c0_24 = arith.constant 0 : index
    %47 = vector.load %arg5[%c0_23, %c0_24] : memref<128x128xf32, #tpu.memory_space<vmem>>, vector<128x128xf32>
    %cst_25 = arith.constant dense<0.000000e+00> : vector<8x128xf32>
    %48 = tpu.matmul %46, %47, %cst_25 {dimension_numbers = #tpu.dot_dimension_numbers<[1], [0], [0], [1], [0, 0, 1, 1], [], []>} : vector<8x128xf32>, vector<128x128xf32>, vector<8x128xf32> -> vector<8x128xf32>
    %49 = vector.extract_strided_slice %1 {offsets = [3, 0], sizes = [1, 128], strides = [1, 1]} : vector<4x128xf32> to vector<1x128xf32>
    %50 = vector.broadcast %49 : vector<1x128xf32> to vector<8x128xf32>
    %51 = arith.addf %48, %50 : vector<8x128xf32>
    %c0_26 = arith.constant 0 : index
    %c0_27 = arith.constant 0 : index
    %52 = vector.load %arg7[%c0_26, %c0_27] : memref<8x128xf32, #tpu.memory_space<vmem>>, vector<8x128xf32>
    tpu.vector_store %arg7[%c0_26, %c0_27], %51 {strides = array<i32>} : memref<8x128xf32, #tpu.memory_space<vmem>>, vector<8x128xf32>,
    return
  }
  func.func @transform_0(%arg0: i32) -> (i32, i32) {
    %c0_i32 = arith.constant 0 : i32
    %c0_i32_0 = arith.constant 0 : i32
    return %arg0, %c0_i32 : i32, i32
  }
  func.func @transform_1(%arg0: i32) -> (i32, i32) {
    %c0_i32 = arith.constant 0 : i32
    %c0_i32_0 = arith.constant 0 : i32
    %c0_i32_1 = arith.constant 0 : i32
    return %c0_i32, %c0_i32_0 : i32, i32
  }
  func.func @transform_2(%arg0: i32) -> (i32, i32) {
    %c0_i32 = arith.constant 0 : i32
    %c0_i32_0 = arith.constant 0 : i32
    %c0_i32_1 = arith.constant 0 : i32
    return %c0_i32, %c0_i32_0 : i32, i32
  }
  func.func @transform_3(%arg0: i32) -> (i32, i32) {
    %c0_i32 = arith.constant 0 : i32
    %c0_i32_0 = arith.constant 0 : i32
    %c0_i32_1 = arith.constant 0 : i32
    return %c0_i32, %c0_i32_0 : i32, i32
  }
  func.func @transform_4(%arg0: i32) -> (i32, i32) {
    %c0_i32 = arith.constant 0 : i32
    %c0_i32_0 = arith.constant 0 : i32
    %c0_i32_1 = arith.constant 0 : i32
    return %c0_i32, %c0_i32_0 : i32, i32
  }
  func.func @transform_5(%arg0: i32) -> (i32, i32) {
    %c0_i32 = arith.constant 0 : i32
    %c0_i32_0 = arith.constant 0 : i32
    %c0_i32_1 = arith.constant 0 : i32
    return %c0_i32, %c0_i32_0 : i32, i32
  }
  func.func @transform_6(%arg0: i32) -> (i32, i32) {
    %c0_i32 = arith.constant 0 : i32
    %c0_i32_0 = arith.constant 0 : i32
    return %arg0, %c0_i32 : i32, i32
  }
}

</mosaic_0001>

<llo_original>
// kernel: tpu_custom_call.1
$region0: #{tpu_custom_call.1}
  #allocation0 [shape = 'u32[]', space=smem, size = 0x4, offset = 0x4, fixed_abs, tag = 'smem constant byte address 0x4 - core index']
  #allocation1 [shape = 'u32[72,128]{1,0:T(1,128)}', space=vmem, size = 0x9000, scoped, tag = 'internal scratch']
  %s0 = inlined_call_operand.hbm [shape: f32[8,128], index: 0, kind: input, shape index: {}]
  %s1 = inlined_call_operand.hbm [shape: f32[128,128], index: 1, kind: input, shape index: {}]
  %s2 = inlined_call_operand.hbm [shape: f32[128,128], index: 2, kind: input, shape index: {}]
  %s3 = inlined_call_operand.hbm [shape: f32[128,128], index: 3, kind: input, shape index: {}]
  %s4 = inlined_call_operand.hbm [shape: f32[128,128], index: 4, kind: input, shape index: {}]
  %s5 = inlined_call_operand.vmem [shape: f32[4,128], index: 5, kind: input, shape index: {}]
  %s6 = inlined_call_operand.hbm [shape: f32[8,128], index: 6, kind: output, shape index: {}]
  %s7 = sld [smem:[#allocation0]]
  $region54: #{tpu_custom_call.1} parent=0
    _
  %s9 = ssub.s32 1, %s7
  %s10 = scalar_select 0, %s9, %s7
  $region1: #{tpu_custom_call.1} parent=0
    #allocation2 [shape = 'u8[4096]{0}', space=vmem, size = 0x1000, scoped, tag = 'input window, operand 0, single buffered']
    #allocation3 [shape = 's32[1]{0}', space=sflag, size = 0x4, scoped, tag = 'scoped memory for tpu_custom_call.1']
    #allocation4 [shape = 's32[1]{0}', space=sflag, size = 0x4, scoped, tag = 'scoped memory for tpu_custom_call.1']
    #allocation5 [shape = 'u8[65536]{0}', space=vmem, size = 0x10000, scoped, tag = 'input window, operand 1, single buffered']
    #allocation6 [shape = 's32[1]{0}', space=sflag, size = 0x4, scoped, tag = 'scoped memory for tpu_custom_call.1']
    #allocation7 [shape = 'u8[65536]{0}', space=vmem, size = 0x10000, scoped, tag = 'input window, operand 2, single buffered']
    #allocation8 [shape = 'u8[65536]{0}', space=vmem, size = 0x10000, scoped, tag = 'input window, operand 3, single buffered']
    #allocation9 [shape = 's32[1]{0}', space=sflag, size = 0x4, scoped, tag = 'scoped memory for tpu_custom_call.1']
    #allocation10 [shape = 'u8[65536]{0}', space=vmem, size = 0x10000, scoped, tag = 'input window, operand 4, single buffered']
    #allocation11 [shape = 'u8[4096]{0}', space=vmem, size = 0x1000, scoped, tag = 'output window, operand 0, single buffered']
    %11 = vsyncpa [#allocation3], 0
    %12 = vsyncpa [#allocation6], 0
    %13 = vsyncpa [#allocation9], 0
    %14 = vsyncpa [#allocation4], 0
    // Predicated region
    $region2: #{tpu_custom_call.1} parent=1 // pred_check
      _
    $region3: #{tpu_custom_call.1} parent=1 // pred_check_branch
      %16 = sbr.rel (0) target = $region5
    $region4: #{tpu_custom_call.1} parent=1 // pred_region
      %18 = vsyncadd [#allocation3], 0
      %s20 = sshll.u32 %s0, 4
      %s21 = int_to_ptr.hbm [resolvable:$true] %s20
      %s22 = sshll.u32 [#allocation2], 4
      %s23 = int_to_ptr.vmem [resolvable:$true] %s22
      %25 = dma.hbm_to_vmem [thread:$0]  %s21, 128, %s23, [#allocation3]
    $region5: #{tpu_custom_call.1} parent=1 // pred_fallthru
      _
    // Predicated region
    $region6: #{tpu_custom_call.1} parent=1 // pred_check
      _
    $region7: #{tpu_custom_call.1} parent=1 // pred_check_branch
      %27 = sbr.rel (0) target = $region9
    $region8: #{tpu_custom_call.1} parent=1 // pred_region
      %29 = vsyncadd [#allocation6], 0
      %s30 = sshll.u32 %s1, 4
      %s31 = int_to_ptr.hbm [resolvable:$true] %s30
      %s32 = sshll.u32 [#allocation5], 4
      %s33 = int_to_ptr.vmem [resolvable:$true] %s32
      %38 = dma.hbm_to_vmem [thread:$0]  %s31, 2048, %s33, [#allocation6], 128, 128, 8
    $region9: #{tpu_custom_call.1} parent=1 // pred_fallthru
      _
    // Predicated region
    $region10: #{tpu_custom_call.1} parent=1 // pred_check
      _
    $region11: #{tpu_custom_call.1} parent=1 // pred_check_branch
      %40 = sbr.rel (0) target = $region13
    $region12: #{tpu_custom_call.1} parent=1 // pred_region
      %42 = vsyncadd [#allocation6], 0
      %s43 = sshll.u32 %s2, 4
      %s44 = int_to_ptr.hbm [resolvable:$true] %s43
      %s45 = sshll.u32 [#allocation7], 4
      %s46 = int_to_ptr.vmem [resolvable:$true] %s45
      %51 = dma.hbm_to_vmem [thread:$0]  %s44, 2048, %s46, [#allocation6], 128, 128, 8
    $region13: #{tpu_custom_call.1} parent=1 // pred_fallthru
      _
    // Predicated region
    $region14: #{tpu_custom_call.1} parent=1 // pred_check
      _
    $region15: #{tpu_custom_call.1} parent=1 // pred_check_branch
      %53 = sbr.rel (0) target = $region17
    $region16: #{tpu_custom_call.1} parent=1 // pred_region
      %55 = vsyncadd [#allocation9], 0
      %s56 = sshll.u32 %s3, 4
      %s57 = int_to_ptr.hbm [resolvable:$true] %s56
      %s58 = sshll.u32 [#allocation8], 4
      %s59 = int_to_ptr.vmem [resolvable:$true] %s58
      %64 = dma.hbm_to_vmem [thread:$0]  %s57, 2048, %s59, [#allocation9], 128, 128, 8
    $region17: #{tpu_custom_call.1} parent=1 // pred_fallthru
      _
    // Predicated region
    $region18: #{tpu_custom_call.1} parent=1 // pred_check
      _
    $region19: #{tpu_custom_call.1} parent=1 // pred_check_branch
      %66 = sbr.rel (0) target = $region21
    $region20: #{tpu_custom_call.1} parent=1 // pred_region
      %68 = vsyncadd [#allocation9], 0
      %s69 = sshll.u32 %s4, 4
      %s70 = int_to_ptr.hbm [resolvable:$true] %s69
      %s71 = sshll.u32 [#allocation10], 4
      %s72 = int_to_ptr.vmem [resolvable:$true] %s71
      %77 = dma.hbm_to_vmem [thread:$0]  %s70, 2048, %s72, [#allocation9], 128, 128, 8
    $region21: #{tpu_custom_call.1} parent=1 // pred_fallthru
      _
    // Predicated region
    $region22: #{tpu_custom_call.1} parent=1 // pred_check
      _
    $region23: #{tpu_custom_call.1} parent=1 // pred_check_branch
      %79 = sbr.rel (0) target = $region25
    $region24: #{tpu_custom_call.1} parent=1 // pred_region
      _
    $region25: #{tpu_custom_call.1} parent=1 // pred_fallthru
      _
    // Predicated region
    $region26: #{tpu_custom_call.1} parent=1 // pred_check
      _
    $region27: #{tpu_custom_call.1} parent=1 // pred_check_branch
      %81 = sbr.rel (0) target = $region29
    $region28: #{tpu_custom_call.1} parent=1 // pred_region
      %83 = dma.done [#allocation3], 128
    $region29: #{tpu_custom_call.1} parent=1 // pred_fallthru
      _
    // Predicated region
    $region30: #{tpu_custom_call.1} parent=1 // pred_check
      _
    $region31: #{tpu_custom_call.1} parent=1 // pred_check_branch
      %85 = sbr.rel (0) target = $region33
    $region32: #{tpu_custom_call.1} parent=1 // pred_region
      %87 = dma.done [#allocation6], 2048
    $region33: #{tpu_custom_call.1} parent=1 // pred_fallthru
      _
    // Predicated region
    $region34: #{tpu_custom_call.1} parent=1 // pred_check
      _
    $region35: #{tpu_custom_call.1} parent=1 // pred_check_branch
      %89 = sbr.rel (0) target = $region37
    $region36: #{tpu_custom_call.1} parent=1 // pred_region
      %91 = dma.done [#allocation6], 2048
    $region37: #{tpu_custom_call.1} parent=1 // pred_fallthru
      _
    // Predicated region
    $region38: #{tpu_custom_call.1} parent=1 // pred_check
      _
    $region39: #{tpu_custom_call.1} parent=1 // pred_check_branch
      %93 = sbr.rel (0) target = $region41
    $region40: #{tpu_custom_call.1} parent=1 // pred_region
      %95 = dma.done [#allocation9], 2048
    $region41: #{tpu_custom_call.1} parent=1 // pred_fallthru
      _
    // Predicated region
    $region42: #{tpu_custom_call.1} parent=1 // pred_check
      _
    $region43: #{tpu_custom_call.1} parent=1 // pred_check_branch
      %97 = sbr.rel (0) target = $region45
    $region44: #{tpu_custom_call.1} parent=1 // pred_region
      %99 = dma.done [#allocation9], 2048
    $region45: #{tpu_custom_call.1} parent=1 // pred_fallthru
      _
    %v100 = vld [vmem:[#allocation2] sm:$0xff]
    %v101 = vld [vmem:[%s5] sm:$0xf]
    %v102 = vld [vmem:[#allocation5] sm:$0xff]
    %v103 = vld [vmem:[#allocation5 + $0x8] sm:$0xff]
    %v104 = vld [vmem:[#allocation5 + $0x10] sm:$0xff]
    %v105 = vld [vmem:[#allocation5 + $0x18] sm:$0xff]
    %v106 = vld [vmem:[#allocation5 + $0x20] sm:$0xff]
    %v107 = vld [vmem:[#allocation5 + $0x28] sm:$0xff]
    %v108 = vld [vmem:[#allocation5 + $0x30] sm:$0xff]
    %v109 = vld [vmem:[#allocation5 + $0x38] sm:$0xff]
    %v110 = vld [vmem:[#allocation5 + $0x40] sm:$0xff]
    %v111 = vld [vmem:[#allocation5 + $0x48] sm:$0xff]
    %v112 = vld [vmem:[#allocation5 + $0x50] sm:$0xff]
    %v113 = vld [vmem:[#allocation5 + $0x58] sm:$0xff]
    %v114 = vld [vmem:[#allocation5 + $0x60] sm:$0xff]
    %v115 = vld [vmem:[#allocation5 + $0x68] sm:$0xff]
    %v116 = vld [vmem:[#allocation5 + $0x70] sm:$0xff]
    %v117 = vld [vmem:[#allocation5 + $0x78] sm:$0xff]
    %v118 = vperm.slane %v101, 0
    %119 = vmatpush.msra.mxu0 %v117
    %120 = vmatpush.msra.mxu0 %v116
    %121 = vmatpush.msra.mxu0 %v115
    %122 = vmatpush.msra.mxu0 %v114
    %123 = vmatpush.msra.mxu0 %v113
    %124 = vmatpush.msra.mxu0 %v112
    %125 = vmatpush.msra.mxu0 %v111
    %126 = vmatpush.msra.mxu0 %v110
    %127 = vmatpush.msra.mxu0 %v109
    %128 = vmatpush.msra.mxu0 %v108
    %129 = vmatpush.msra.mxu0 %v107
    %130 = vmatpush.msra.mxu0 %v106
    %131 = vmatpush.msra.mxu0 %v105
    %132 = vmatpush.msra.mxu0 %v104
    %133 = vmatpush.msra.mxu0 %v103
    %134 = vmatpush.msra.mxu0 %v102
    %135 = vmatmul.f32.gmra.mxu0 %v100
    %v136 = vpop.f32.mrf.mxu0
    %v137 = vadd.f32 %v118, %v136
    %138 = vdwg.mxu0
    %vm139 = vcmp.gt.f32.partialorder %v137, 0.0
    %v140 = vmul.f32 %v137, 1.442695
    %v141 = vpow.pop %v140
    %v142 = vsub.f32 %v141, 1.0
    %v143 = vmul.f32 %v142, 1.6732632
    %v144 = vsel %vm139, %v137, %v143
    %v145 = vmul.f32 %v144, 1.050701
    %v146 = vld [vmem:[#allocation7] sm:$0xff]
    %v147 = vld [vmem:[#allocation7 + $0x8] sm:$0xff]
    %v148 = vld [vmem:[#allocation7 + $0x10] sm:$0xff]
    %v149 = vld [vmem:[#allocation7 + $0x18] sm:$0xff]
    %v150 = vld [vmem:[#allocation7 + $0x20] sm:$0xff]
    %v151 = vld [vmem:[#allocation7 + $0x28] sm:$0xff]
    %v152 = vld [vmem:[#allocation7 + $0x30] sm:$0xff]
    %v153 = vld [vmem:[#allocation7 + $0x38] sm:$0xff]
    %v154 = vld [vmem:[#allocation7 + $0x40] sm:$0xff]
    %v155 = vld [vmem:[#allocation7 + $0x48] sm:$0xff]
    %v156 = vld [vmem:[#allocation7 + $0x50] sm:$0xff]
    %v157 = vld [vmem:[#allocation7 + $0x58] sm:$0xff]
    %v158 = vld [vmem:[#allocation7 + $0x60] sm:$0xff]
    %v159 = vld [vmem:[#allocation7 + $0x68] sm:$0xff]
    %v160 = vld [vmem:[#allocation7 + $0x70] sm:$0xff]
    %v161 = vld [vmem:[#allocation7 + $0x78] sm:$0xff]
    %v162 = vperm.slane %v101, 1
    %163 = vmatpush.msra.mxu0 %v161
    %164 = vmatpush.msra.mxu0 %v160
    %165 = vmatpush.msra.mxu0 %v159
    %166 = vmatpush.msra.mxu0 %v158
    %167 = vmatpush.msra.mxu0 %v157
    %168 = vmatpush.msra.mxu0 %v156
    %169 = vmatpush.msra.mxu0 %v155
    %170 = vmatpush.msra.mxu0 %v154
    %171 = vmatpush.msra.mxu0 %v153
    %172 = vmatpush.msra.mxu0 %v152
    %173 = vmatpush.msra.mxu0 %v151
    %174 = vmatpush.msra.mxu0 %v150
    %175 = vmatpush.msra.mxu0 %v149
    %176 = vmatpush.msra.mxu0 %v148
    %177 = vmatpush.msra.mxu0 %v147
    %178 = vmatpush.msra.mxu0 %v146
    %179 = vmatmul.f32.gmra.mxu0 %v145
    %v180 = vpop.f32.mrf.mxu0
    %v181 = vadd.f32 %v162, %v180
    %182 = vdwg.mxu0
    %vm183 = vcmp.gt.f32.partialorder %v181, 0.0
    %v184 = vmul.f32 %v181, 1.442695
    %v185 = vpow.pop %v184
    %v186 = vsub.f32 %v185, 1.0
    %v187 = vmul.f32 %v186, 1.6732632
    %v188 = vsel %vm183, %v181, %v187
    %v189 = vmul.f32 %v188, 1.050701
    %v190 = vld [vmem:[#allocation8] sm:$0xff]
    %v191 = vld [vmem:[#allocation8 + $0x8] sm:$0xff]
    %v192 = vld [vmem:[#allocation8 + $0x10] sm:$0xff]
    %v193 = vld [vmem:[#allocation8 + $0x18] sm:$0xff]
    %v194 = vld [vmem:[#allocation8 + $0x20] sm:$0xff]
    %v195 = vld [vmem:[#allocation8 + $0x28] sm:$0xff]
    %v196 = vld [vmem:[#allocation8 + $0x30] sm:$0xff]
    %v197 = vld [vmem:[#allocation8 + $0x38] sm:$0xff]
    %v198 = vld [vmem:[#allocation8 + $0x40] sm:$0xff]
    %v199 = vld [vmem:[#allocation8 + $0x48] sm:$0xff]
    %v200 = vld [vmem:[#allocation8 + $0x50] sm:$0xff]
    %v201 = vld [vmem:[#allocation8 + $0x58] sm:$0xff]
    %v202 = vld [vmem:[#allocation8 + $0x60] sm:$0xff]
    %v203 = vld [vmem:[#allocation8 + $0x68] sm:$0xff]
    %v204 = vld [vmem:[#allocation8 + $0x70] sm:$0xff]
    %v205 = vld [vmem:[#allocation8 + $0x78] sm:$0xff]
    %v206 = vperm.slane %v101, 2
    %207 = vmatpush.msra.mxu0 %v205
    %208 = vmatpush.msra.mxu0 %v204
    %209 = vmatpush.msra.mxu0 %v203
    %210 = vmatpush.msra.mxu0 %v202
    %211 = vmatpush.msra.mxu0 %v201
    %212 = vmatpush.msra.mxu0 %v200
    %213 = vmatpush.msra.mxu0 %v199
    %214 = vmatpush.msra.mxu0 %v198
    %215 = vmatpush.msra.mxu0 %v197
    %216 = vmatpush.msra.mxu0 %v196
    %217 = vmatpush.msra.mxu0 %v195
    %218 = vmatpush.msra.mxu0 %v194
    %219 = vmatpush.msra.mxu0 %v193
    %220 = vmatpush.msra.mxu0 %v192
    %221 = vmatpush.msra.mxu0 %v191
    %222 = vmatpush.msra.mxu0 %v190
    %223 = vmatmul.f32.gmra.mxu0 %v189
    %v224 = vpop.f32.mrf.mxu0
    %v225 = vadd.f32 %v206, %v224
    %226 = vdwg.mxu0
    %vm227 = vcmp.gt.f32.partialorder %v225, 0.0
    %v228 = vmul.f32 %v225, 1.442695
    %v229 = vpow.pop %v228
    %v230 = vsub.f32 %v229, 1.0
    %v231 = vmul.f32 %v230, 1.6732632
    %v232 = vsel %vm227, %v225, %v231
    %v233 = vmul.f32 %v232, 1.050701
    %v234 = vld [vmem:[#allocation10] sm:$0xff]
    %v235 = vld [vmem:[#allocation10 + $0x8] sm:$0xff]
    %v236 = vld [vmem:[#allocation10 + $0x10] sm:$0xff]
    %v237 = vld [vmem:[#allocation10 + $0x18] sm:$0xff]
    %v238 = vld [vmem:[#allocation10 + $0x20] sm:$0xff]
    %v239 = vld [vmem:[#allocation10 + $0x28] sm:$0xff]
    %v240 = vld [vmem:[#allocation10 + $0x30] sm:$0xff]
    %v241 = vld [vmem:[#allocation10 + $0x38] sm:$0xff]
    %v242 = vld [vmem:[#allocation10 + $0x40] sm:$0xff]
    %v243 = vld [vmem:[#allocation10 + $0x48] sm:$0xff]
    %v244 = vld [vmem:[#allocation10 + $0x50] sm:$0xff]
    %v245 = vld [vmem:[#allocation10 + $0x58] sm:$0xff]
    %v246 = vld [vmem:[#allocation10 + $0x60] sm:$0xff]
    %v247 = vld [vmem:[#allocation10 + $0x68] sm:$0xff]
    %v248 = vld [vmem:[#allocation10 + $0x70] sm:$0xff]
    %v249 = vld [vmem:[#allocation10 + $0x78] sm:$0xff]
    %v250 = vperm.slane %v101, 3
    %251 = vmatpush.msra.mxu0 %v249
    %252 = vmatpush.msra.mxu0 %v248
    %253 = vmatpush.msra.mxu0 %v247
    %254 = vmatpush.msra.mxu0 %v246
    %255 = vmatpush.msra.mxu0 %v245
    %256 = vmatpush.msra.mxu0 %v244
    %257 = vmatpush.msra.mxu0 %v243
    %258 = vmatpush.msra.mxu0 %v242
    %259 = vmatpush.msra.mxu0 %v241
    %260 = vmatpush.msra.mxu0 %v240
    %261 = vmatpush.msra.mxu0 %v239
    %262 = vmatpush.msra.mxu0 %v238
    %263 = vmatpush.msra.mxu0 %v237
    %264 = vmatpush.msra.mxu0 %v236
    %265 = vmatpush.msra.mxu0 %v235
    %266 = vmatpush.msra.mxu0 %v234
    %267 = vmatmul.f32.gmra.mxu0 %v233
    %v268 = vpop.f32.mrf.mxu0
    %v269 = vadd.f32 %v250, %v268
    %270 = vdwg.mxu0
    %271 = vst [vmem:[#allocation11] sm:$0xff] %v269
    // Predicated region
    $region46: #{tpu_custom_call.1} parent=1 // pred_check
      _
    $region47: #{tpu_custom_call.1} parent=1 // pred_check_branch
      %273 = sbr.rel (0) target = $region49
    $region48: #{tpu_custom_call.1} parent=1 // pred_region
      %275 = vsyncadd [#allocation4], 0
      %s277 = sshll.u32 [#allocation11], 4
      %s278 = int_to_ptr.vmem [resolvable:$true] %s277
      %s279 = sshll.u32 %s6, 4
      %s280 = int_to_ptr.hbm [resolvable:$true] %s279
      %282 = dma.vmem_to_hbm [thread:$0]  %s278, 128, %s280, [#allocation4]
    $region49: #{tpu_custom_call.1} parent=1 // pred_fallthru
      _
    // Predicated region
    $region50: #{tpu_custom_call.1} parent=1 // pred_check
      _
    $region51: #{tpu_custom_call.1} parent=1 // pred_check_branch
      %284 = sbr.rel (0) target = $region53
    $region52: #{tpu_custom_call.1} parent=1 // pred_region
      %286 = dma.done [#allocation4], 128
    $region53: #{tpu_custom_call.1} parent=1 // pred_fallthru
      _
    %287 = vsyncpa [#allocation3], 1
    %288 = vsyncpa [#allocation6], 1
    %289 = vsyncpa [#allocation9], 1
    %290 = vsyncpa [#allocation4], 1

</llo_original>
